<compile_context>
chip_gen: v6e
topology: v6e:2x2x1
jax: 0.10.0
libtpu: 0.0.40
codegen_flags: <defaults>
</compile_context>

<pallas_src>
import functools

import jax
import jax.numpy as jnp
from jax.experimental import pallas as pl
from jax.experimental.pallas import tpu as pltpu

_LANE = 128      # vreg lane width
_SUBLANE = 8     # vreg sublane count (f32)


def _round_up(x, m):
    return ((x + m - 1) // m) * m


def _fused_fc_kernel(x_ref, w_ref, b_ref, o_ref, *, num_layers, negative_slope):
    """Fused forward: h = leaky_relu(h @ W_l + b_l) for l in 0..L-1, all in VMEM.

    x_ref: (bm, Dpad) f32 activation tile
    w_ref: (L, Dpad, Dpad) f32 stacked, zero-padded weights (stored (in, out))
    b_ref: (L, 1, Dpad)   f32 stacked, zero-padded biases
    o_ref: (bm, Dpad) f32 output tile (only first real Dout columns meaningful)
    """
    h = x_ref[...]
    for l in range(num_layers):  # static unroll at trace time
        y = jnp.dot(h, w_ref[l], preferred_element_type=jnp.float32) + b_ref[l]
        h = jnp.where(y >= 0, y, negative_slope * y)
    o_ref[...] = h.astype(o_ref.dtype)


def fc_network_forward(x, params, *, negative_slope=0.01, max_block_m=512):
    """FCNetwork.forward: x -> leaky_relu(Linear(x)) repeated, as one Pallas kernel.

    x: (B, Din) f32; params: list of (w: (Din_l, Dout_l), b: (1, Dout_l)) f32.
    """
    B, Din = x.shape
    dims = [Din] + [w.shape[1] for (w, _) in params]
    L = len(params)
    Dpad = _round_up(max(dims), _LANE)            # one lane-dense width for every layer
    d_out = dims[-1]

    # Stack + zero-pad weights/biases so padded lanes stay exactly zero through the net.
    w_stack = jnp.zeros((L, Dpad, Dpad), jnp.float32)
    b_stack = jnp.zeros((L, 1, Dpad), jnp.float32)
    for i, (w, b) in enumerate(params):
        w_stack = w_stack.at[i, : w.shape[0], : w.shape[1]].set(w.astype(jnp.float32))
        b_stack = b_stack.at[i, 0, : b.shape[-1]].set(b.reshape(-1).astype(jnp.float32))

    # Batch tiling: sublane-aligned tiles, capped at max_block_m rows, on a parallel grid axis.
    bm = min(_round_up(B, _SUBLANE), max_block_m)
    Bpad = _round_up(B, bm)
    x_pad = jnp.zeros((Bpad, Dpad), jnp.float32).at[:B, :Din].set(x.astype(jnp.float32))
    grid = (Bpad // bm,)

    # VMEM budget: resident weights/biases + double-buffered x/out tiles, 2x headroom,
    # clamped below v7x's 64 MiB per-TC VMEM.
    vmem_bytes = 4 * (L * Dpad * Dpad + L * Dpad + 2 * 2 * bm * Dpad) * 2
    vmem_limit = int(min(max(vmem_bytes, 16 << 20), 64 << 20))

    kernel = functools.partial(
        _fused_fc_kernel, num_layers=L, negative_slope=negative_slope
    )

    out_pad = pl.pallas_call(
        kernel,
        out_shape=jax.ShapeDtypeStruct((Bpad, Dpad), jnp.float32),
        grid_spec=pltpu.PrefetchScalarGridSpec(
            num_scalar_prefetch=0,
            grid=grid,
            in_specs=[
                pl.BlockSpec((bm, Dpad), lambda i: (i, 0)),          # x tile (pipelined over batch)
                pl.BlockSpec((L, Dpad, Dpad), lambda i: (0, 0, 0)),  # all weights, resident
                pl.BlockSpec((L, 1, Dpad), lambda i: (0, 0, 0)),     # all biases, resident
            ],
            out_specs=pl.BlockSpec((bm, Dpad), lambda i: (i, 0)),
        ),
        compiler_params=pltpu.CompilerParams(
            dimension_semantics=("parallel",),        # v7x: shard batch tiles across 2 TCs
            vmem_limit_bytes=vmem_limit,
        ),
    )(x_pad, w_stack, b_stack)

    return out_pad[:B, :d_out]


def init_fc_network_params(key, input_dim, hiddens):
    """Deterministic parameter init mirroring FCNetwork.__init__ shapes.

    Weights: xavier_uniform over torch's (out, in) shape; stored transposed as (in, out)
    so the kernel computes x @ W + b (== x @ weight.T + bias in PyTorch).
    Biases: uniform(-1/sqrt(fan_in), 1/sqrt(fan_in)) (PyTorch Linear default).
    """
    dims = [input_dim] + list(hiddens)
    params = []
    for fan_in, fan_out in zip(dims[:-1], dims[1:]):
        kw, kb, key = jax.random.split(key, 3)
        limit = jnp.sqrt(6.0 / (fan_in + fan_out))  # xavier_uniform, gain=1
        w = jax.random.uniform(kw, (fan_in, fan_out), jnp.float32, -limit, limit)
        b_bound = 1.0 / jnp.sqrt(jnp.float32(fan_in))
        b = jax.random.uniform(kb, (1, fan_out), jnp.float32, -b_bound, b_bound)
        params.append((w, b))
    return params


def _reference_forward(x, params, *, negative_slope=0.01):
    for w, b in params:
        y = x @ w + b
        x = jnp.where(y >= 0, y, negative_slope * y)
    return x


if __name__ == "__main__":
    key = jax.random.PRNGKey(0)
    key_x, key_p = jax.random.split(key)

    batch = 8
    input_dim = 16
    hiddens = [32, 32, 8]

    x = jax.random.normal(key_x, (batch, input_dim), jnp.float32)
    params = init_fc_network_params(key_p, input_dim, hiddens)

    fwd = jax.jit(fc_network_forward)
    out = fwd(x, params)
    out = jax.block_until_ready(out)

    ref = _reference_forward(x, params)
    assert out.shape == (batch, hiddens[-1])
    assert jnp.allclose(out, ref, atol=1e-4, rtol=1e-4), "mismatch vs reference"

    print("KERNEL_OK")
</pallas_src>

<mosaic_0001>
module attributes {stable_mosaic.version = 11 : i64} {
  func.func @_fused_fc_kernel(%arg0: i32, %arg1: memref<8x128xf32, #tpu.memory_space<vmem>>, %arg2: memref<3x128x128xf32, #tpu.memory_space<vmem>>, %arg3: memref<3x1x128xf32, #tpu.memory_space<vmem>>, %arg4: memref<8x128xf32, #tpu.memory_space<vmem>>) attributes {dimension_semantics = [#tpu.dimension_semantics<parallel>], iteration_bounds = array<i64: 1>, scalar_prefetch = 0 : i64, scratch_operands = 0 : i64, tpu.core_type = #tpu.core_type<tc>, window_params = [{transform_indices = @transform_0, window_bounds = array<i64: 8, 128>}, {pipeline_mode = #tpu.pipeline_mode<synchronous>, transform_indices = @transform_1, window_bounds = array<i64: 3, 128, 128>}, {pipeline_mode = #tpu.pipeline_mode<synchronous>, transform_indices = @transform_2, window_bounds = array<i64: 3, 1, 128>}, {transform_indices = @transform_3, window_bounds = array<i64: 8, 128>}]} {
    %c0 = arith.constant 0 : index
    %c0_0 = arith.constant 0 : index
    %0 = vector.load %arg1[%c0, %c0_0] : memref<8x128xf32, #tpu.memory_space<vmem>>, vector<8x128xf32>
    %c0_1 = arith.constant 0 : index
    %c0_2 = arith.constant 0 : index
    %c0_3 = arith.constant 0 : index
    %1 = vector.load %arg2[%c0_1, %c0_2, %c0_3] : memref<3x128x128xf32, #tpu.memory_space<vmem>>, vector<1x128x128xf32>
    %2 = vector.shape_cast %1 : vector<1x128x128xf32> to vector<128x128xf32>
    %cst = arith.constant dense<0.000000e+00> : vector<8x128xf32>
    %3 = tpu.matmul %0, %2, %cst {dimension_numbers = #tpu.dot_dimension_numbers<[1], [0], [0], [1], [0, 0, 1, 1], [], []>} : vector<8x128xf32>, vector<128x128xf32>, vector<8x128xf32> -> vector<8x128xf32>
    %c0_4 = arith.constant 0 : index
    %c0_5 = arith.constant 0 : index
    %c0_6 = arith.constant 0 : index
    %4 = vector.load %arg3[%c0_4, %c0_5, %c0_6] : memref<3x1x128xf32, #tpu.memory_space<vmem>>, vector<1x1x128xf32>
    %5 = vector.shape_cast %4 : vector<1x1x128xf32> to vector<1x128xf32>
    %6 = vector.broadcast %5 : vector<1x128xf32> to vector<8x128xf32>
    %7 = arith.addf %3, %6 : vector<8x128xf32>
    %cst_7 = arith.constant 0.000000e+00 : f32
    %8 = vector.broadcast %cst_7 : f32 to vector<8x128xf32>
    %9 = arith.cmpf oge, %7, %8 : vector<8x128xf32>
    %cst_8 = arith.constant 0.00999999977 : f32
    %10 = vector.broadcast %cst_8 : f32 to vector<8x128xf32>
    %11 = arith.mulf %10, %7 : vector<8x128xf32>
    %12 = arith.select %9, %7, %11 : vector<8x128xi1>, vector<8x128xf32>
    %c1 = arith.constant 1 : index
    %c0_9 = arith.constant 0 : index
    %c0_10 = arith.constant 0 : index
    %13 = vector.load %arg2[%c1, %c0_9, %c0_10] : memref<3x128x128xf32, #tpu.memory_space<vmem>>, vector<1x128x128xf32>
    %14 = vector.shape_cast %13 : vector<1x128x128xf32> to vector<128x128xf32>
    %cst_11 = arith.constant dense<0.000000e+00> : vector<8x128xf32>
    %15 = tpu.matmul %12, %14, %cst_11 {dimension_numbers = #tpu.dot_dimension_numbers<[1], [0], [0], [1], [0, 0, 1, 1], [], []>} : vector<8x128xf32>, vector<128x128xf32>, vector<8x128xf32> -> vector<8x128xf32>
    %c1_12 = arith.constant 1 : index
    %c0_13 = arith.constant 0 : index
    %c0_14 = arith.constant 0 : index
    %16 = vector.load %arg3[%c1_12, %c0_13, %c0_14] : memref<3x1x128xf32, #tpu.memory_space<vmem>>, vector<1x1x128xf32>
    %17 = vector.shape_cast %16 : vector<1x1x128xf32> to vector<1x128xf32>
    %18 = vector.broadcast %17 : vector<1x128xf32> to vector<8x128xf32>
    %19 = arith.addf %15, %18 : vector<8x128xf32>
    %cst_15 = arith.constant 0.000000e+00 : f32
    %20 = vector.broadcast %cst_15 : f32 to vector<8x128xf32>
    %21 = arith.cmpf oge, %19, %20 : vector<8x128xf32>
    %cst_16 = arith.constant 0.00999999977 : f32
    %22 = vector.broadcast %cst_16 : f32 to vector<8x128xf32>
    %23 = arith.mulf %22, %19 : vector<8x128xf32>
    %24 = arith.select %21, %19, %23 : vector<8x128xi1>, vector<8x128xf32>
    %c2 = arith.constant 2 : index
    %c0_17 = arith.constant 0 : index
    %c0_18 = arith.constant 0 : index
    %25 = vector.load %arg2[%c2, %c0_17, %c0_18] : memref<3x128x128xf32, #tpu.memory_space<vmem>>, vector<1x128x128xf32>
    %26 = vector.shape_cast %25 : vector<1x128x128xf32> to vector<128x128xf32>
    %cst_19 = arith.constant dense<0.000000e+00> : vector<8x128xf32>
    %27 = tpu.matmul %24, %26, %cst_19 {dimension_numbers = #tpu.dot_dimension_numbers<[1], [0], [0], [1], [0, 0, 1, 1], [], []>} : vector<8x128xf32>, vector<128x128xf32>, vector<8x128xf32> -> vector<8x128xf32>
    %c2_20 = arith.constant 2 : index
    %c0_21 = arith.constant 0 : index
    %c0_22 = arith.constant 0 : index
    %28 = vector.load %arg3[%c2_20, %c0_21, %c0_22] : memref<3x1x128xf32, #tpu.memory_space<vmem>>, vector<1x1x128xf32>
    %29 = vector.shape_cast %28 : vector<1x1x128xf32> to vector<1x128xf32>
    %30 = vector.broadcast %29 : vector<1x128xf32> to vector<8x128xf32>
    %31 = arith.addf %27, %30 : vector<8x128xf32>
    %cst_23 = arith.constant 0.000000e+00 : f32
    %32 = vector.broadcast %cst_23 : f32 to vector<8x128xf32>
    %33 = arith.cmpf oge, %31, %32 : vector<8x128xf32>
    %cst_24 = arith.constant 0.00999999977 : f32
    %34 = vector.broadcast %cst_24 : f32 to vector<8x128xf32>
    %35 = arith.mulf %34, %31 : vector<8x128xf32>
    %36 = arith.select %33, %31, %35 : vector<8x128xi1>, vector<8x128xf32>
    %c0_25 = arith.constant 0 : index
    %c0_26 = arith.constant 0 : index
    %37 = vector.load %arg4[%c0_25, %c0_26] : memref<8x128xf32, #tpu.memory_space<vmem>>, vector<8x128xf32>
    tpu.vector_store %arg4[%c0_25, %c0_26], %36 {strides = array<i32>} : memref<8x128xf32, #tpu.memory_space<vmem>>, vector<8x128xf32>,
    return
  }
  func.func @transform_0(%arg0: i32) -> (i32, i32) {
    %c0_i32 = arith.constant 0 : i32
    %c0_i32_0 = arith.constant 0 : i32
    return %arg0, %c0_i32 : i32, i32
  }
  func.func @transform_1(%arg0: i32) -> (i32, i32, i32) {
    %c0_i32 = arith.constant 0 : i32
    %c0_i32_0 = arith.constant 0 : i32
    %c0_i32_1 = arith.constant 0 : i32
    %c0_i32_2 = arith.constant 0 : i32
    return %c0_i32, %c0_i32_0, %c0_i32_1 : i32, i32, i32
  }
  func.func @transform_2(%arg0: i32) -> (i32, i32, i32) {
    %c0_i32 = arith.constant 0 : i32
    %c0_i32_0 = arith.constant 0 : i32
    %c0_i32_1 = arith.constant 0 : i32
    %c0_i32_2 = arith.constant 0 : i32
    return %c0_i32, %c0_i32_0, %c0_i32_1 : i32, i32, i32
  }
  func.func @transform_3(%arg0: i32) -> (i32, i32) {
    %c0_i32 = arith.constant 0 : i32
    %c0_i32_0 = arith.constant 0 : i32
    return %arg0, %c0_i32 : i32, i32
  }
}

</mosaic_0001>

<llo_original>
// kernel: fc_network_forward.1
$region0: #{fc_network_forward.1}
  #allocation0 [shape = 'u32[]', space=smem, size = 0x4, offset = 0x4, fixed_abs, tag = 'smem constant byte address 0x4 - core index']
  #allocation1 [shape = 'u32[144,128]{1,0:T(1,128)}', space=vmem, size = 0x12000, scoped, tag = 'internal scratch']
  %s0 = inlined_call_operand.vmem [shape: f32[8,128], index: 0, kind: input, shape index: {}]
  %s1 = inlined_call_operand.vmem [shape: f32[3,128,128], index: 1, kind: input, shape index: {}]
  %s2 = inlined_call_operand.vmem [shape: f32[3,1,128], index: 2, kind: input, shape index: {}]
  %s3 = inlined_call_operand.hbm [shape: f32[8,128], index: 3, kind: output, shape index: {}]
  %s4 = sld [smem:[#allocation0]]
  $region22: #{fc_network_forward.1} parent=0
    _
  %s6 = ssub.s32 1, %s4
  %s7 = scalar_select 0, %s6, %s4
  $region1: #{fc_network_forward.1} parent=0
    #allocation2 [shape = 'u8[4096]{0}', space=vmem, size = 0x1000, scoped, tag = 'output window, operand 0, single buffered']
    #allocation3 [shape = 's32[1]{0}', space=sflag, size = 0x4, scoped, tag = 'scoped memory for fc_network_forward.1']
    %8 = vsyncpa [#allocation3], 0
    // Predicated region
    $region2: #{fc_network_forward.1} parent=1 // pred_check
      _
    $region3: #{fc_network_forward.1} parent=1 // pred_check_branch
      %10 = sbr.rel (0) target = $region5
    $region4: #{fc_network_forward.1} parent=1 // pred_region
      _
    $region5: #{fc_network_forward.1} parent=1 // pred_fallthru
      _
    // Predicated region
    $region6: #{fc_network_forward.1} parent=1 // pred_check
      _
    $region7: #{fc_network_forward.1} parent=1 // pred_check_branch
      %12 = sbr.rel (0) target = $region9
    $region8: #{fc_network_forward.1} parent=1 // pred_region
      _
    $region9: #{fc_network_forward.1} parent=1 // pred_fallthru
      _
    // Predicated region
    $region10: #{fc_network_forward.1} parent=1 // pred_check
      _
    $region11: #{fc_network_forward.1} parent=1 // pred_check_branch
      %14 = sbr.rel (0) target = $region13
    $region12: #{fc_network_forward.1} parent=1 // pred_region
      _
    $region13: #{fc_network_forward.1} parent=1 // pred_fallthru
      _
    %v15 = vld [vmem:[%s0] sm:$0xff]
    %v16 = vld [vmem:[%s1] sm:$0xff]
    %v17 = vld [vmem:[%s1 + $0x8] sm:$0xff]
    %v18 = vld [vmem:[%s1 + $0x10] sm:$0xff]
    %v19 = vld [vmem:[%s1 + $0x18] sm:$0xff]
    %v20 = vld [vmem:[%s1 + $0x20] sm:$0xff]
    %v21 = vld [vmem:[%s1 + $0x28] sm:$0xff]
    %v22 = vld [vmem:[%s1 + $0x30] sm:$0xff]
    %v23 = vld [vmem:[%s1 + $0x38] sm:$0xff]
    %v24 = vld [vmem:[%s1 + $0x40] sm:$0xff]
    %v25 = vld [vmem:[%s1 + $0x48] sm:$0xff]
    %v26 = vld [vmem:[%s1 + $0x50] sm:$0xff]
    %v27 = vld [vmem:[%s1 + $0x58] sm:$0xff]
    %v28 = vld [vmem:[%s1 + $0x60] sm:$0xff]
    %v29 = vld [vmem:[%s1 + $0x68] sm:$0xff]
    %v30 = vld [vmem:[%s1 + $0x70] sm:$0xff]
    %v31 = vld [vmem:[%s1 + $0x78] sm:$0xff]
    %v32 = vld [vmem:[%s2] sm:$0x1]
    %v34 = vlaneseq
    %v35 = vshrl.u32 %v34, 7
    %v36 = vsub.s32 0, %v35
    %v37 = vrot.slane %v32, %v36
    %39 = vmatprep.subr.mxu0 0.0
    %40 = vmatpush1.msra.mxu0 %v31
    %41 = vmatprep.subr.mxu0 0.0
    %42 = vmatpush1.msra.mxu0 %v30
    %43 = vmatprep.subr.mxu0 0.0
    %44 = vmatpush1.msra.mxu0 %v29
    %45 = vmatprep.subr.mxu0 0.0
    %46 = vmatpush1.msra.mxu0 %v28
    %47 = vmatprep.subr.mxu0 0.0
    %48 = vmatpush1.msra.mxu0 %v27
    %49 = vmatprep.subr.mxu0 0.0
    %50 = vmatpush1.msra.mxu0 %v26
    %51 = vmatprep.subr.mxu0 0.0
    %52 = vmatpush1.msra.mxu0 %v25
    %53 = vmatprep.subr.mxu0 0.0
    %54 = vmatpush1.msra.mxu0 %v24
    %55 = vmatprep.subr.mxu0 0.0
    %56 = vmatpush1.msra.mxu0 %v23
    %57 = vmatprep.subr.mxu0 0.0
    %58 = vmatpush1.msra.mxu0 %v22
    %59 = vmatprep.subr.mxu0 0.0
    %60 = vmatpush1.msra.mxu0 %v21
    %61 = vmatprep.subr.mxu0 0.0
    %62 = vmatpush1.msra.mxu0 %v20
    %63 = vmatprep.subr.mxu0 0.0
    %64 = vmatpush1.msra.mxu0 %v19
    %65 = vmatprep.subr.mxu0 0.0
    %66 = vmatpush1.msra.mxu0 %v18
    %67 = vmatprep.subr.mxu0 0.0
    %68 = vmatpush1.msra.mxu0 %v17
    %69 = vmatprep.subr.mxu0 0.0
    %70 = vmatpush1.msra.mxu0 %v16
    %71 = vmatprep.subr.mxu0 0.0
    %72 = vmatpush2.msra.mxu0 0.0
    %73 = vmatprep.subr.mxu0 0.0
    %74 = vmatpush2.msra.mxu0 0.0
    %75 = vmatprep.subr.mxu0 0.0
    %76 = vmatpush2.msra.mxu0 0.0
    %77 = vmatprep.subr.mxu0 0.0
    %78 = vmatpush2.msra.mxu0 0.0
    %79 = vmatprep.subr.mxu0 0.0
    %80 = vmatpush2.msra.mxu0 0.0
    %81 = vmatprep.subr.mxu0 0.0
    %82 = vmatpush2.msra.mxu0 0.0
    %83 = vmatprep.subr.mxu0 0.0
    %84 = vmatpush2.msra.mxu0 0.0
    %85 = vmatprep.subr.mxu0 0.0
    %86 = vmatpush2.msra.mxu0 0.0
    %87 = vmatprep.subr.mxu0 0.0
    %88 = vmatpush2.msra.mxu0 0.0
    %89 = vmatprep.subr.mxu0 0.0
    %90 = vmatpush2.msra.mxu0 0.0
    %91 = vmatprep.subr.mxu0 0.0
    %92 = vmatpush2.msra.mxu0 0.0
    %93 = vmatprep.subr.mxu0 0.0
    %94 = vmatpush2.msra.mxu0 0.0
    %95 = vmatprep.subr.mxu0 0.0
    %96 = vmatpush2.msra.mxu0 0.0
    %97 = vmatprep.subr.mxu0 0.0
    %98 = vmatpush2.msra.mxu0 0.0
    %99 = vmatprep.subr.mxu0 0.0
    %100 = vmatpush2.msra.mxu0 0.0
    %101 = vmatprep.subr.mxu0 0.0
    %102 = vmatpush2.msra.mxu0 0.0
    %103 = vmatprep.mubr.f32.mxu0 0.0
    %104 = vmatmul.mubr.f32.gmra.mxu0 %v15
    %v105 = vpop.f32.mrf.mxu0
    %v106 = vadd.f32 %v37, %v105
    %v107 = vpop.f32.mrf.mxu0
    %108 = vdwg.mxu0
    %vm109 = vcmp.ge.f32.partialorder %v106, 0.0
    %v110 = vmul.f32 %v106, 0.01
    %v111 = vsel %vm109, %v106, %v110
    %s112 = scalar_lea.vmem %s1, 128
    %v113 = vld [vmem:[%s112] sm:$0xff]
    %v114 = vld [vmem:[%s112 + $0x8] sm:$0xff]
    %v115 = vld [vmem:[%s112 + $0x10] sm:$0xff]
    %v116 = vld [vmem:[%s112 + $0x18] sm:$0xff]
    %v117 = vld [vmem:[%s112 + $0x20] sm:$0xff]
    %v118 = vld [vmem:[%s112 + $0x28] sm:$0xff]
    %v119 = vld [vmem:[%s112 + $0x30] sm:$0xff]
    %v120 = vld [vmem:[%s112 + $0x38] sm:$0xff]
    %v121 = vld [vmem:[%s112 + $0x40] sm:$0xff]
    %v122 = vld [vmem:[%s112 + $0x48] sm:$0xff]
    %v123 = vld [vmem:[%s112 + $0x50] sm:$0xff]
    %v124 = vld [vmem:[%s112 + $0x58] sm:$0xff]
    %v125 = vld [vmem:[%s112 + $0x60] sm:$0xff]
    %v126 = vld [vmem:[%s112 + $0x68] sm:$0xff]
    %v127 = vld [vmem:[%s112 + $0x70] sm:$0xff]
    %v128 = vld [vmem:[%s112 + $0x78] sm:$0xff]
    %s129 = scalar_lea.vmem %s2, 1
    %v130 = vld [vmem:[%s129] sm:$0x1]
    %v132 = vlaneseq
    %v133 = vshrl.u32 %v132, 7
    %v134 = vsub.s32 0, %v133
    %v135 = vrot.slane %v130, %v134
    %137 = vmatprep.subr.mxu0 0.0
    %138 = vmatpush1.msra.mxu0 %v128
    %139 = vmatprep.subr.mxu0 0.0
    %140 = vmatpush1.msra.mxu0 %v127
    %141 = vmatprep.subr.mxu0 0.0
    %142 = vmatpush1.msra.mxu0 %v126
    %143 = vmatprep.subr.mxu0 0.0
    %144 = vmatpush1.msra.mxu0 %v125
    %145 = vmatprep.subr.mxu0 0.0
    %146 = vmatpush1.msra.mxu0 %v124
    %147 = vmatprep.subr.mxu0 0.0
    %148 = vmatpush1.msra.mxu0 %v123
    %149 = vmatprep.subr.mxu0 0.0
    %150 = vmatpush1.msra.mxu0 %v122
    %151 = vmatprep.subr.mxu0 0.0
    %152 = vmatpush1.msra.mxu0 %v121
    %153 = vmatprep.subr.mxu0 0.0
    %154 = vmatpush1.msra.mxu0 %v120
    %155 = vmatprep.subr.mxu0 0.0
    %156 = vmatpush1.msra.mxu0 %v119
    %157 = vmatprep.subr.mxu0 0.0
    %158 = vmatpush1.msra.mxu0 %v118
    %159 = vmatprep.subr.mxu0 0.0
    %160 = vmatpush1.msra.mxu0 %v117
    %161 = vmatprep.subr.mxu0 0.0
    %162 = vmatpush1.msra.mxu0 %v116
    %163 = vmatprep.subr.mxu0 0.0
    %164 = vmatpush1.msra.mxu0 %v115
    %165 = vmatprep.subr.mxu0 0.0
    %166 = vmatpush1.msra.mxu0 %v114
    %167 = vmatprep.subr.mxu0 0.0
    %168 = vmatpush1.msra.mxu0 %v113
    %169 = vmatprep.subr.mxu0 0.0
    %170 = vmatpush2.msra.mxu0 0.0
    %171 = vmatprep.subr.mxu0 0.0
    %172 = vmatpush2.msra.mxu0 0.0
    %173 = vmatprep.subr.mxu0 0.0
    %174 = vmatpush2.msra.mxu0 0.0
    %175 = vmatprep.subr.mxu0 0.0
    %176 = vmatpush2.msra.mxu0 0.0
    %177 = vmatprep.subr.mxu0 0.0
    %178 = vmatpush2.msra.mxu0 0.0
    %179 = vmatprep.subr.mxu0 0.0
    %180 = vmatpush2.msra.mxu0 0.0
    %181 = vmatprep.subr.mxu0 0.0
    %182 = vmatpush2.msra.mxu0 0.0
    %183 = vmatprep.subr.mxu0 0.0
    %184 = vmatpush2.msra.mxu0 0.0
    %185 = vmatprep.subr.mxu0 0.0
    %186 = vmatpush2.msra.mxu0 0.0
    %187 = vmatprep.subr.mxu0 0.0
    %188 = vmatpush2.msra.mxu0 0.0
    %189 = vmatprep.subr.mxu0 0.0
    %190 = vmatpush2.msra.mxu0 0.0
    %191 = vmatprep.subr.mxu0 0.0
    %192 = vmatpush2.msra.mxu0 0.0
    %193 = vmatprep.subr.mxu0 0.0
    %194 = vmatpush2.msra.mxu0 0.0
    %195 = vmatprep.subr.mxu0 0.0
    %196 = vmatpush2.msra.mxu0 0.0
    %197 = vmatprep.subr.mxu0 0.0
    %198 = vmatpush2.msra.mxu0 0.0
    %199 = vmatprep.subr.mxu0 0.0
    %200 = vmatpush2.msra.mxu0 0.0
    %201 = vmatprep.mubr.f32.mxu0 0.0
    %202 = vmatmul.mubr.f32.gmra.mxu0 %v111
    %v203 = vpop.f32.mrf.mxu0
    %v204 = vadd.f32 %v135, %v203
    %v205 = vpop.f32.mrf.mxu0
    %206 = vdwg.mxu0
    %vm207 = vcmp.ge.f32.partialorder %v204, 0.0
    %v208 = vmul.f32 %v204, 0.01
    %v209 = vsel %vm207, %v204, %v208
    %s210 = scalar_lea.vmem %s1, 256
    %v211 = vld [vmem:[%s210] sm:$0xff]
    %v212 = vld [vmem:[%s210 + $0x8] sm:$0xff]
    %v213 = vld [vmem:[%s210 + $0x10] sm:$0xff]
    %v214 = vld [vmem:[%s210 + $0x18] sm:$0xff]
    %v215 = vld [vmem:[%s210 + $0x20] sm:$0xff]
    %v216 = vld [vmem:[%s210 + $0x28] sm:$0xff]
    %v217 = vld [vmem:[%s210 + $0x30] sm:$0xff]
    %v218 = vld [vmem:[%s210 + $0x38] sm:$0xff]
    %v219 = vld [vmem:[%s210 + $0x40] sm:$0xff]
    %v220 = vld [vmem:[%s210 + $0x48] sm:$0xff]
    %v221 = vld [vmem:[%s210 + $0x50] sm:$0xff]
    %v222 = vld [vmem:[%s210 + $0x58] sm:$0xff]
    %v223 = vld [vmem:[%s210 + $0x60] sm:$0xff]
    %v224 = vld [vmem:[%s210 + $0x68] sm:$0xff]
    %v225 = vld [vmem:[%s210 + $0x70] sm:$0xff]
    %v226 = vld [vmem:[%s210 + $0x78] sm:$0xff]
    %s227 = scalar_lea.vmem %s2, 2
    %v228 = vld [vmem:[%s227] sm:$0x1]
    %v230 = vlaneseq
    %v231 = vshrl.u32 %v230, 7
    %v232 = vsub.s32 0, %v231
    %v233 = vrot.slane %v228, %v232
    %235 = vmatprep.subr.mxu0 0.0
    %236 = vmatpush1.msra.mxu0 %v226
    %237 = vmatprep.subr.mxu0 0.0
    %238 = vmatpush1.msra.mxu0 %v225
    %239 = vmatprep.subr.mxu0 0.0
    %240 = vmatpush1.msra.mxu0 %v224
    %241 = vmatprep.subr.mxu0 0.0
    %242 = vmatpush1.msra.mxu0 %v223
    %243 = vmatprep.subr.mxu0 0.0
    %244 = vmatpush1.msra.mxu0 %v222
    %245 = vmatprep.subr.mxu0 0.0
    %246 = vmatpush1.msra.mxu0 %v221
    %247 = vmatprep.subr.mxu0 0.0
    %248 = vmatpush1.msra.mxu0 %v220
    %249 = vmatprep.subr.mxu0 0.0
    %250 = vmatpush1.msra.mxu0 %v219
    %251 = vmatprep.subr.mxu0 0.0
    %252 = vmatpush1.msra.mxu0 %v218
    %253 = vmatprep.subr.mxu0 0.0
    %254 = vmatpush1.msra.mxu0 %v217
    %255 = vmatprep.subr.mxu0 0.0
    %256 = vmatpush1.msra.mxu0 %v216
    %257 = vmatprep.subr.mxu0 0.0
    %258 = vmatpush1.msra.mxu0 %v215
    %259 = vmatprep.subr.mxu0 0.0
    %260 = vmatpush1.msra.mxu0 %v214
    %261 = vmatprep.subr.mxu0 0.0
    %262 = vmatpush1.msra.mxu0 %v213
    %263 = vmatprep.subr.mxu0 0.0
    %264 = vmatpush1.msra.mxu0 %v212
    %265 = vmatprep.subr.mxu0 0.0
    %266 = vmatpush1.msra.mxu0 %v211
    %267 = vmatprep.subr.mxu0 0.0
    %268 = vmatpush2.msra.mxu0 0.0
    %269 = vmatprep.subr.mxu0 0.0
    %270 = vmatpush2.msra.mxu0 0.0
    %271 = vmatprep.subr.mxu0 0.0
    %272 = vmatpush2.msra.mxu0 0.0
    %273 = vmatprep.subr.mxu0 0.0
    %274 = vmatpush2.msra.mxu0 0.0
    %275 = vmatprep.subr.mxu0 0.0
    %276 = vmatpush2.msra.mxu0 0.0
    %277 = vmatprep.subr.mxu0 0.0
    %278 = vmatpush2.msra.mxu0 0.0
    %279 = vmatprep.subr.mxu0 0.0
    %280 = vmatpush2.msra.mxu0 0.0
    %281 = vmatprep.subr.mxu0 0.0
    %282 = vmatpush2.msra.mxu0 0.0
    %283 = vmatprep.subr.mxu0 0.0
    %284 = vmatpush2.msra.mxu0 0.0
    %285 = vmatprep.subr.mxu0 0.0
    %286 = vmatpush2.msra.mxu0 0.0
    %287 = vmatprep.subr.mxu0 0.0
    %288 = vmatpush2.msra.mxu0 0.0
    %289 = vmatprep.subr.mxu0 0.0
    %290 = vmatpush2.msra.mxu0 0.0
    %291 = vmatprep.subr.mxu0 0.0
    %292 = vmatpush2.msra.mxu0 0.0
    %293 = vmatprep.subr.mxu0 0.0
    %294 = vmatpush2.msra.mxu0 0.0
    %295 = vmatprep.subr.mxu0 0.0
    %296 = vmatpush2.msra.mxu0 0.0
    %297 = vmatprep.subr.mxu0 0.0
    %298 = vmatpush2.msra.mxu0 0.0
    %299 = vmatprep.mubr.f32.mxu0 0.0
    %300 = vmatmul.mubr.f32.gmra.mxu0 %v209
    %v301 = vpop.f32.mrf.mxu0
    %v302 = vadd.f32 %v233, %v301
    %v303 = vpop.f32.mrf.mxu0
    %304 = vdwg.mxu0
    %vm305 = vcmp.ge.f32.partialorder %v302, 0.0
    %v306 = vmul.f32 %v302, 0.01
    %v307 = vsel %vm305, %v302, %v306
    %308 = vst [vmem:[#allocation2] sm:$0xff] %v307
    // Predicated region
    $region14: #{fc_network_forward.1} parent=1 // pred_check
      _
    $region15: #{fc_network_forward.1} parent=1 // pred_check_branch
      %310 = sbr.rel (0) target = $region17
    $region16: #{fc_network_forward.1} parent=1 // pred_region
      %s312 = ssub.s32 128, 128
      %313 = vsyncadd [#allocation3], %s312
      %s315 = sshll.u32 [#allocation2], 4
      %s316 = int_to_ptr.vmem [resolvable:$true] %s315
      %318 = dma.vmem_to_hbm [thread:$0]  %s316, 128, %s3, [#allocation3]
    $region17: #{fc_network_forward.1} parent=1 // pred_fallthru
      _
    // Predicated region
    $region18: #{fc_network_forward.1} parent=1 // pred_check
      _
    $region19: #{fc_network_forward.1} parent=1 // pred_check_branch
      %320 = sbr.rel (0) target = $region21
    $region20: #{fc_network_forward.1} parent=1 // pred_region
      %321 = dma.done [#allocation3], 128
    $region21: #{fc_network_forward.1} parent=1 // pred_fallthru
      _
    %322 = vsyncpa [#allocation3], 1

</llo_original>
